<compile_context>
chip_gen: v7x
topology: tpu7x:2x2x1
jax: 0.10.0
libtpu: 0.0.40
codegen_flags: <defaults>
</compile_context>

<pallas_src>
from functools import partial

import jax
import jax.numpy as jnp
from jax.experimental import pallas as pl
from jax.experimental.pallas import tpu as pltpu

_LANE = 128


def _round_up(x, m):
    return ((x + m - 1) // m) * m


def _vmem_limit(bytes_needed):
    # 2x headroom, at least 32 MiB, and stay under v7x's 64 MiB physical VMEM.
    return int(min(max(2 * bytes_needed, 32 << 20), 56 << 20))


# ----------------------------------------------------------------------------
# Glue: symmetrically-normalized dense adjacency, matching normalize_adj()
# (duplicate edges are summed, exactly like torch.sparse coalescing).
# ----------------------------------------------------------------------------
def normalize_adj_dense(edge_index, num_nodes):
    rows, cols = edge_index[0], edge_index[1]
    values = jnp.ones(rows.shape[0], dtype=jnp.float32)
    a = jnp.zeros((num_nodes, num_nodes), dtype=jnp.float32)
    a = a.at[rows, cols].add(values)
    deg = a.sum(axis=1)
    deg_inv_sqrt = jnp.where(deg > 0, deg ** -0.5, 0.0)
    return deg_inv_sqrt[:, None] * a * deg_inv_sqrt[None, :]   # D^-1/2 A D^-1/2


# ----------------------------------------------------------------------------
# Fused path: all layers in ONE pallas_call (small graphs, everything in VMEM)
# ----------------------------------------------------------------------------
def _make_fused_call(n_pad, d_pad, num_layers):
    inv = 1.0 / (num_layers + 1)
    # Row-block the matmul so operands / temporaries stay tile-sized.
    if n_pad <= 512:
        blk = n_pad
    else:
        blk = next(b for b in (512, 384, 256, 128) if n_pad % b == 0)
    n_blk = n_pad // blk

    def kernel(a_ref, x0_ref, out_ref, xa_ref, xb_ref, acc_ref):
        acc_ref[...] = x0_ref[...]                       # layer-0 contribution
        xa_ref[...] = x0_ref[...].astype(jnp.bfloat16)
        bufs = (xa_ref, xb_ref)
        for layer in range(num_layers):                  # static unroll (small L)
            src = bufs[layer % 2]
            dst = bufs[(layer + 1) % 2]
            for r in range(n_blk):                       # row-blocked A @ x
                rows = pl.ds(r * blk, blk)
                y = jnp.dot(a_ref[rows, :], src[...],
                            preferred_element_type=jnp.float32)
                acc_ref[rows, :] += y
                dst[rows, :] = y.astype(jnp.bfloat16)    # next layer's operand
        out_ref[...] = acc_ref[...] * inv                # folded 1/(L+1)

    # VMEM working set (double-buffered ins/out + scratch), for the limit hint.
    vmem_bytes = (2 * n_pad * n_pad * 2          # A (bf16)
                  + 2 * n_pad * d_pad * 4        # x0 in (f32)
                  + 2 * n_pad * d_pad * 4        # out (f32)
                  + 2 * n_pad * d_pad * 2        # x ping/pong (bf16)
                  + n_pad * d_pad * 4)           # running sum (f32)

    return pl.pallas_call(
        kernel,
        out_shape=jax.ShapeDtypeStruct((n_pad, d_pad), jnp.float32),
        grid_spec=pltpu.PrefetchScalarGridSpec(
            num_scalar_prefetch=0,
            grid=(1,),
            in_specs=[
                pl.BlockSpec((n_pad, n_pad), lambda i: (0, 0)),   # A (bf16)
                pl.BlockSpec((n_pad, d_pad), lambda i: (0, 0)),   # x0 (f32)
            ],
            out_specs=pl.BlockSpec((n_pad, d_pad), lambda i: (0, 0)),
            scratch_shapes=[
                pltpu.VMEM((n_pad, d_pad), jnp.bfloat16),   # x ping
                pltpu.VMEM((n_pad, d_pad), jnp.bfloat16),   # x pong
                pltpu.VMEM((n_pad, d_pad), jnp.float32),    # running layer sum
            ],
        ),
        compiler_params=pltpu.CompilerParams(
            dimension_semantics=("arbitrary",),
            vmem_limit_bytes=_vmem_limit(vmem_bytes)),
    )


# ----------------------------------------------------------------------------
# Tiled path: one pallas_call per layer (larger graphs)
# ----------------------------------------------------------------------------
def _choose_row_tiling(n):
    # Prefer large row tiles; prefer an even row-tile count (v7x has 2
    # TensorCores sharing the "parallel" axis); prefer minimal padding.
    cands = []
    for tile_m in (512, 384, 256, 128):
        n_pad = _round_up(n, tile_m)
        n_tiles = n_pad // tile_m
        balanced = (n_tiles == 1) or (n_tiles % 2 == 0)
        cands.append((not balanced, n_pad, -tile_m))
    cands.sort()
    _, n_pad, neg_tm = cands[0]
    return n_pad, -neg_tm


def _choose_k_tile(n_pad):
    for tile_k in (1024, 512, 384, 256, 128):
        if n_pad % tile_k == 0:
            return tile_k
    return 128


def _make_layer_call(n_pad, d_pad, tile_m, tile_k, x_resident, final_scale):
    grid = (n_pad // tile_m, n_pad // tile_k)

    def kernel(a_ref, x_ref, accin_ref, y_ref, accout_ref, mm_ref):
        k = pl.program_id(1)

        @pl.when(k == 0)
        def _():
            mm_ref[...] = jnp.zeros_like(mm_ref)

        if x_resident:
            start = pl.multiple_of(k * tile_k, tile_k)
            x_blk = x_ref[pl.ds(start, tile_k), :]
        else:
            x_blk = x_ref[...]
        mm_ref[...] += jnp.dot(a_ref[...], x_blk,
                               preferred_element_type=jnp.float32)

        @pl.when(k == pl.num_programs(1) - 1)
        def _():
            y_ref[...] = mm_ref[...].astype(y_ref.dtype)    # bf16 next-layer x
            acc = accin_ref[...] + mm_ref[...]
            if final_scale is not None:                     # folded 1/(L+1)
                acc = acc * final_scale
            accout_ref[...] = acc

    if x_resident:
        x_spec = pl.BlockSpec((n_pad, d_pad), lambda m, k: (0, 0))
    else:
        x_spec = pl.BlockSpec((tile_k, d_pad), lambda m, k: (k, 0))

    vmem_bytes = (2 * tile_m * tile_k * 2
                  + (2 * n_pad * d_pad * 2 if x_resident
                     else 2 * tile_k * d_pad * 2)
                  + 2 * tile_m * d_pad * 4      # acc_in
                  + 2 * tile_m * d_pad * 2      # y out (bf16)
                  + 2 * tile_m * d_pad * 4      # acc_out
                  + tile_m * d_pad * 4)         # mm scratch

    return pl.pallas_call(
        kernel,
        out_shape=(
            jax.ShapeDtypeStruct((n_pad, d_pad), jnp.bfloat16),   # y = A @ x
            jax.ShapeDtypeStruct((n_pad, d_pad), jnp.float32),    # running sum
        ),
        grid_spec=pltpu.PrefetchScalarGridSpec(
            num_scalar_prefetch=0,
            grid=grid,
            in_specs=[
                pl.BlockSpec((tile_m, tile_k), lambda m, k: (m, k)),   # A bf16
                x_spec,                                                # x bf16
                pl.BlockSpec((tile_m, d_pad), lambda m, k: (m, 0)),    # acc_in
            ],
            out_specs=[
                pl.BlockSpec((tile_m, d_pad), lambda m, k: (m, 0)),
                pl.BlockSpec((tile_m, d_pad), lambda m, k: (m, 0)),
            ],
            scratch_shapes=[pltpu.VMEM((tile_m, d_pad), jnp.float32)],
        ),
        input_output_aliases={2: 1},     # acc updated in place (no new buffer)
        compiler_params=pltpu.CompilerParams(
            dimension_semantics=("parallel", "arbitrary"),
            vmem_limit_bytes=_vmem_limit(vmem_bytes)),
    )


def _propagate_tiled(a_p, x_p, num_layers, tile_m, tile_k):
    n_pad, d_pad = x_p.shape
    x_resident = (n_pad * d_pad * 2) <= (4 << 20)
    last_call = _make_layer_call(n_pad, d_pad, tile_m, tile_k, x_resident,
                                 final_scale=1.0 / (num_layers + 1))
    mid_call = (_make_layer_call(n_pad, d_pad, tile_m, tile_k, x_resident,
                                 final_scale=None)
                if num_layers > 1 else None)

    acc = x_p                              # layer-0 contribution (f32)
    x_cur = x_p.astype(jnp.bfloat16)       # matmul operand (bf16)
    for layer in range(num_layers):
        call = last_call if layer == num_layers - 1 else mid_call
        x_cur, acc = call(a_p, x_cur, acc)
    return acc                             # last layer already scaled by 1/(L+1)


# ----------------------------------------------------------------------------
# Jitted propagation entry point
# ----------------------------------------------------------------------------
@partial(jax.jit, static_argnames=("num_layers", "path"))
def lightgcn_propagate(a_norm, x0, *, num_layers, path="auto"):
    """a_norm: (N, N) normalized adjacency (used as bf16); x0: (N, D) f32."""
    n, d = x0.shape
    d_pad = _round_up(d, _LANE)

    if path == "auto":
        path = "fused" if _round_up(n, _LANE) <= 1024 else "tiled"

    if path == "fused":
        n_pad = _round_up(n, _LANE)
        tile_m = tile_k = None
    else:
        n_pad, tile_m = _choose_row_tiling(n)
        tile_k = _choose_k_tile(n_pad)

    a_p = jnp.pad(a_norm.astype(jnp.bfloat16),
                  ((0, n_pad - n), (0, n_pad - n)))
    x_p = jnp.pad(x0.astype(jnp.float32), ((0, n_pad - n), (0, d_pad - d)))

    if path == "fused":
        final = _make_fused_call(n_pad, d_pad, num_layers)(a_p, x_p)
    else:
        final = _propagate_tiled(a_p, x_p, num_layers, tile_m, tile_k)
    return final[:n, :d]


# ----------------------------------------------------------------------------
# LightGCN model (forward only)
# ----------------------------------------------------------------------------
class LightGCNModelPallas:
    def __init__(self, num_users, num_items, embedding_dim=64, num_layers=3,
                 key=None):
        self.num_users = num_users
        self.num_items = num_items
        self.num_nodes = num_users + num_items
        self.embedding_dim = embedding_dim
        self.num_layers = num_layers
        if key is None:
            key = jax.random.PRNGKey(0)
        ku, ki = jax.random.split(key)
        # xavier_uniform_ on an Embedding weight: bound = sqrt(6/(rows+dim))
        bu = (6.0 / (num_users + embedding_dim)) ** 0.5
        bi = (6.0 / (num_items + embedding_dim)) ** 0.5
        self.user_emb = jax.random.uniform(
            ku, (num_users, embedding_dim), jnp.float32, -bu, bu)
        self.item_emb = jax.random.uniform(
            ki, (num_items, embedding_dim), jnp.float32, -bi, bi)
        self._cached_edges = None
        self._cached_a_bf16 = None

    def _normalized_adjacency(self, edge_index):
        # Hoisted & cached: the O(N^2) normalization + bf16 cast only depends
        # on the graph, not on the embeddings — pay for it once per graph.
        if self._cached_a_bf16 is None or self._cached_edges is not edge_index:
            a = normalize_adj_dense(edge_index, self.num_nodes)
            self._cached_a_bf16 = a.astype(jnp.bfloat16)
            self._cached_edges = edge_index
        return self._cached_a_bf16

    def forward(self, edge_index, path="auto"):
        a_bf16 = self._normalized_adjacency(edge_index)
        x0 = jnp.concatenate([self.user_emb, self.item_emb], axis=0)
        final = lightgcn_propagate(a_bf16, x0,
                                   num_layers=self.num_layers, path=path)
        return final[: self.num_users], final[self.num_users:]


# ----------------------------------------------------------------------------
# Pure-JAX references
# ----------------------------------------------------------------------------
def _reference_forward_f32(model, edge_index):
    a = normalize_adj_dense(edge_index, model.num_nodes)
    x = jnp.concatenate([model.user_emb, model.item_emb], axis=0)
    acc = x
    for _ in range(model.num_layers):
        x = a @ x
        acc = acc + x
    final = acc / (model.num_layers + 1)
    return final[: model.num_users], final[model.num_users:]


def _reference_forward_bf16(model, edge_index):
    # mirrors the kernel numerics (bf16 operands, f32 accumulation / layer sum)
    a = normalize_adj_dense(edge_index, model.num_nodes).astype(jnp.bfloat16)
    x = jnp.concatenate([model.user_emb, model.item_emb], axis=0)
    acc = x
    x_cur = x.astype(jnp.bfloat16)
    for _ in range(model.num_layers):
        y = jnp.dot(a, x_cur, preferred_element_type=jnp.float32)
        acc = acc + y
        x_cur = y.astype(jnp.bfloat16)
    final = acc / (model.num_layers + 1)
    return final[: model.num_users], final[model.num_users:]


if __name__ == "__main__":
    def run_case(num_users, num_items, emb_dim, num_layers, n_edges, seed, path):
        model = LightGCNModelPallas(num_users, num_items, emb_dim, num_layers,
                                    key=jax.random.PRNGKey(0))
        # deterministic bipartite user-item interactions (made symmetric)
        ku, ki = jax.random.split(jax.random.PRNGKey(seed))
        u = jax.random.randint(ku, (n_edges,), 0, num_users)
        i = jax.random.randint(ki, (n_edges,), 0, num_items) + num_users
        edge_index = jnp.stack([jnp.concatenate([u, i]),
                                jnp.concatenate([i, u])])

        users, items = model.forward(edge_index, path=path)
        users = jax.block_until_ready(users)
        items = jax.block_until_ready(items)

        # tight check vs bf16-consistent reference (validates tiling/accum)
        bu, bi = _reference_forward_bf16(model, edge_index)
        assert jnp.allclose(users, bu, atol=5e-3, rtol=5e-3), f"{path}: users vs bf16 ref"
        assert jnp.allclose(items, bi, atol=5e-3, rtol=5e-3), f"{path}: items vs bf16 ref"
        # loose check vs full-f32 reference (bf16 adjacency drift)
        fu, fi = _reference_forward_f32(model, edge_index)
        assert jnp.allclose(users, fu, atol=3e-2, rtol=3e-2), f"{path}: users vs f32 ref"
        assert jnp.allclose(items, fi, atol=3e-2, rtol=3e-2), f"{path}: items vs f32 ref"

    # N = 128, D 64->128: auto -> fused single-call path (all layers in VMEM)
    run_case(48, 80, 64, 3, 256, 1, "auto")
    # N = 640 (padded 768): fused path, row-blocked in-VMEM matmuls
    run_case(300, 340, 64, 3, 2048, 2, "fused")
    # N = 640 (padded 768): tiled per-layer path, 2x2 grid of 384x384 A tiles,
    # VMEM-resident x, in-place acc alias, bf16 y output, folded final scale
    run_case(300, 340, 64, 3, 2048, 2, "tiled")

    print("KERNEL_OK")
</pallas_src>

<mosaic_0001>
module attributes {stable_mosaic.version = 11 : i64} {
  func.func @kernel(%arg0: i32, %arg1: memref<128x128xbf16, #tpu.memory_space<vmem>>, %arg2: memref<128x128xf32, #tpu.memory_space<vmem>>, %arg3: memref<128x128xf32, #tpu.memory_space<vmem>>, %arg4: memref<128x128xbf16, #tpu.memory_space<vmem>>, %arg5: memref<128x128xbf16, #tpu.memory_space<vmem>>, %arg6: memref<128x128xf32, #tpu.memory_space<vmem>>) attributes {dimension_semantics = [#tpu.dimension_semantics<arbitrary>], iteration_bounds = array<i64: 1>, scalar_prefetch = 0 : i64, scratch_operands = 3 : i64, tpu.core_type = #tpu.core_type<tc>, window_params = [{pipeline_mode = #tpu.pipeline_mode<synchronous>, transform_indices = @transform_0, window_bounds = array<i64: 128, 128>}, {pipeline_mode = #tpu.pipeline_mode<synchronous>, transform_indices = @transform_1, window_bounds = array<i64: 128, 128>}, {pipeline_mode = #tpu.pipeline_mode<synchronous>, transform_indices = @transform_2, window_bounds = array<i64: 128, 128>}]} {
    %c0 = arith.constant 0 : index
    %c0_0 = arith.constant 0 : index
    %0 = vector.load %arg2[%c0, %c0_0] : memref<128x128xf32, #tpu.memory_space<vmem>>, vector<128x128xf32>
    %c0_1 = arith.constant 0 : index
    %c0_2 = arith.constant 0 : index
    %1 = vector.load %arg6[%c0_1, %c0_2] : memref<128x128xf32, #tpu.memory_space<vmem>>, vector<128x128xf32>
    tpu.vector_store %arg6[%c0_1, %c0_2], %0 {strides = array<i32>} : memref<128x128xf32, #tpu.memory_space<vmem>>, vector<128x128xf32>,
    %c0_3 = arith.constant 0 : index
    %c0_4 = arith.constant 0 : index
    %2 = vector.load %arg2[%c0_3, %c0_4] : memref<128x128xf32, #tpu.memory_space<vmem>>, vector<128x128xf32>
    %3 = arith.truncf %2 : vector<128x128xf32> to vector<128x128xbf16>
    %c0_5 = arith.constant 0 : index
    %c0_6 = arith.constant 0 : index
    %4 = vector.load %arg4[%c0_5, %c0_6] : memref<128x128xbf16, #tpu.memory_space<vmem>>, vector<128x128xbf16>
    tpu.vector_store %arg4[%c0_5, %c0_6], %3 {strides = array<i32>} : memref<128x128xbf16, #tpu.memory_space<vmem>>, vector<128x128xbf16>,
    %c0_7 = arith.constant 0 : index
    %c0_8 = arith.constant 0 : index
    %5 = vector.load %arg1[%c0_7, %c0_8] : memref<128x128xbf16, #tpu.memory_space<vmem>>, vector<128x128xbf16>
    %c0_9 = arith.constant 0 : index
    %c0_10 = arith.constant 0 : index
    %6 = vector.load %arg4[%c0_9, %c0_10] : memref<128x128xbf16, #tpu.memory_space<vmem>>, vector<128x128xbf16>
    %cst = arith.constant dense<0.000000e+00> : vector<128x128xf32>
    %7 = tpu.matmul %5, %6, %cst {dimension_numbers = #tpu.dot_dimension_numbers<[1], [0], [0], [1], [0, 0, 1, 1], [], []>} : vector<128x128xbf16>, vector<128x128xbf16>, vector<128x128xf32> -> vector<128x128xf32>
    %c0_11 = arith.constant 0 : index
    %c0_12 = arith.constant 0 : index
    %8 = vector.load %arg6[%c0_11, %c0_12] : memref<128x128xf32, #tpu.memory_space<vmem>>, vector<128x128xf32>
    %9 = arith.addf %8, %7 : vector<128x128xf32>
    %c0_13 = arith.constant 0 : index
    %c0_14 = arith.constant 0 : index
    %10 = vector.load %arg6[%c0_13, %c0_14] : memref<128x128xf32, #tpu.memory_space<vmem>>, vector<128x128xf32>
    tpu.vector_store %arg6[%c0_13, %c0_14], %9 {strides = array<i32>} : memref<128x128xf32, #tpu.memory_space<vmem>>, vector<128x128xf32>,
    %11 = arith.truncf %7 : vector<128x128xf32> to vector<128x128xbf16>
    %c0_15 = arith.constant 0 : index
    %c0_16 = arith.constant 0 : index
    %12 = vector.load %arg5[%c0_15, %c0_16] : memref<128x128xbf16, #tpu.memory_space<vmem>>, vector<128x128xbf16>
    tpu.vector_store %arg5[%c0_15, %c0_16], %11 {strides = array<i32>} : memref<128x128xbf16, #tpu.memory_space<vmem>>, vector<128x128xbf16>,
    %c0_17 = arith.constant 0 : index
    %c0_18 = arith.constant 0 : index
    %13 = vector.load %arg1[%c0_17, %c0_18] : memref<128x128xbf16, #tpu.memory_space<vmem>>, vector<128x128xbf16>
    %c0_19 = arith.constant 0 : index
    %c0_20 = arith.constant 0 : index
    %14 = vector.load %arg5[%c0_19, %c0_20] : memref<128x128xbf16, #tpu.memory_space<vmem>>, vector<128x128xbf16>
    %cst_21 = arith.constant dense<0.000000e+00> : vector<128x128xf32>
    %15 = tpu.matmul %13, %14, %cst_21 {dimension_numbers = #tpu.dot_dimension_numbers<[1], [0], [0], [1], [0, 0, 1, 1], [], []>} : vector<128x128xbf16>, vector<128x128xbf16>, vector<128x128xf32> -> vector<128x128xf32>
    %c0_22 = arith.constant 0 : index
    %c0_23 = arith.constant 0 : index
    %16 = vector.load %arg6[%c0_22, %c0_23] : memref<128x128xf32, #tpu.memory_space<vmem>>, vector<128x128xf32>
    %17 = arith.addf %16, %15 : vector<128x128xf32>
    %c0_24 = arith.constant 0 : index
    %c0_25 = arith.constant 0 : index
    %18 = vector.load %arg6[%c0_24, %c0_25] : memref<128x128xf32, #tpu.memory_space<vmem>>, vector<128x128xf32>
    tpu.vector_store %arg6[%c0_24, %c0_25], %17 {strides = array<i32>} : memref<128x128xf32, #tpu.memory_space<vmem>>, vector<128x128xf32>,
    %19 = arith.truncf %15 : vector<128x128xf32> to vector<128x128xbf16>
    %c0_26 = arith.constant 0 : index
    %c0_27 = arith.constant 0 : index
    %20 = vector.load %arg4[%c0_26, %c0_27] : memref<128x128xbf16, #tpu.memory_space<vmem>>, vector<128x128xbf16>
    tpu.vector_store %arg4[%c0_26, %c0_27], %19 {strides = array<i32>} : memref<128x128xbf16, #tpu.memory_space<vmem>>, vector<128x128xbf16>,
    %c0_28 = arith.constant 0 : index
    %c0_29 = arith.constant 0 : index
    %21 = vector.load %arg1[%c0_28, %c0_29] : memref<128x128xbf16, #tpu.memory_space<vmem>>, vector<128x128xbf16>
    %c0_30 = arith.constant 0 : index
    %c0_31 = arith.constant 0 : index
    %22 = vector.load %arg4[%c0_30, %c0_31] : memref<128x128xbf16, #tpu.memory_space<vmem>>, vector<128x128xbf16>
    %cst_32 = arith.constant dense<0.000000e+00> : vector<128x128xf32>
    %23 = tpu.matmul %21, %22, %cst_32 {dimension_numbers = #tpu.dot_dimension_numbers<[1], [0], [0], [1], [0, 0, 1, 1], [], []>} : vector<128x128xbf16>, vector<128x128xbf16>, vector<128x128xf32> -> vector<128x128xf32>
    %c0_33 = arith.constant 0 : index
    %c0_34 = arith.constant 0 : index
    %24 = vector.load %arg6[%c0_33, %c0_34] : memref<128x128xf32, #tpu.memory_space<vmem>>, vector<128x128xf32>
    %25 = arith.addf %24, %23 : vector<128x128xf32>
    %c0_35 = arith.constant 0 : index
    %c0_36 = arith.constant 0 : index
    %26 = vector.load %arg6[%c0_35, %c0_36] : memref<128x128xf32, #tpu.memory_space<vmem>>, vector<128x128xf32>
    tpu.vector_store %arg6[%c0_35, %c0_36], %25 {strides = array<i32>} : memref<128x128xf32, #tpu.memory_space<vmem>>, vector<128x128xf32>,
    %27 = arith.truncf %23 : vector<128x128xf32> to vector<128x128xbf16>
    %c0_37 = arith.constant 0 : index
    %c0_38 = arith.constant 0 : index
    %28 = vector.load %arg5[%c0_37, %c0_38] : memref<128x128xbf16, #tpu.memory_space<vmem>>, vector<128x128xbf16>
    tpu.vector_store %arg5[%c0_37, %c0_38], %27 {strides = array<i32>} : memref<128x128xbf16, #tpu.memory_space<vmem>>, vector<128x128xbf16>,
    %c0_39 = arith.constant 0 : index
    %c0_40 = arith.constant 0 : index
    %29 = vector.load %arg6[%c0_39, %c0_40] : memref<128x128xf32, #tpu.memory_space<vmem>>, vector<128x128xf32>
    %cst_41 = arith.constant 2.500000e-01 : f32
    %30 = vector.broadcast %cst_41 : f32 to vector<128x128xf32>
    %31 = arith.mulf %29, %30 : vector<128x128xf32>
    %c0_42 = arith.constant 0 : index
    %c0_43 = arith.constant 0 : index
    %32 = vector.load %arg3[%c0_42, %c0_43] : memref<128x128xf32, #tpu.memory_space<vmem>>, vector<128x128xf32>
    tpu.vector_store %arg3[%c0_42, %c0_43], %31 {strides = array<i32>} : memref<128x128xf32, #tpu.memory_space<vmem>>, vector<128x128xf32>,
    return
  }
  func.func @transform_0(%arg0: i32) -> (i32, i32) {
    %c0_i32 = arith.constant 0 : i32
    %c0_i32_0 = arith.constant 0 : i32
    %c0_i32_1 = arith.constant 0 : i32
    return %c0_i32, %c0_i32_0 : i32, i32
  }
  func.func @transform_1(%arg0: i32) -> (i32, i32) {
    %c0_i32 = arith.constant 0 : i32
    %c0_i32_0 = arith.constant 0 : i32
    %c0_i32_1 = arith.constant 0 : i32
    return %c0_i32, %c0_i32_0 : i32, i32
  }
  func.func @transform_2(%arg0: i32) -> (i32, i32) {
    %c0_i32 = arith.constant 0 : i32
    %c0_i32_0 = arith.constant 0 : i32
    %c0_i32_1 = arith.constant 0 : i32
    return %c0_i32, %c0_i32_0 : i32, i32
  }
}

</mosaic_0001>

<llo_original>
// kernel: lightgcn_propagate.1
$region0: #{lightgcn_propagate.1}
  #allocation0 [shape = 'u32[]', space=smem, size = 0x4, offset = 0x4, fixed_abs, tag = 'smem constant byte address 0x4 - core index']
  #allocation1 [shape = 'u32[144,128]{1,0:T(1,128)}', space=vmem, size = 0x12000, scoped, tag = 'internal scratch']
  #allocation2 [shape = 'bf16[128,128]{1,0:T(16,128)(2,1)}', space=vmem, size = 0x8000, scoped, tag = 'scratch operand']
  #allocation3 [shape = 'bf16[128,128]{1,0:T(16,128)(2,1)}', space=vmem, size = 0x8000, scoped, tag = 'scratch operand']
  #allocation4 [shape = 'f32[128,128]{1,0:T(8,128)}', space=vmem, size = 0x10000, scoped, tag = 'scratch operand']
  %s0 = inlined_call_operand.vmem [shape: bf16[128,128], index: 0, kind: input, shape index: {}]
  %s1 = inlined_call_operand.vmem [shape: f32[128,128], index: 1, kind: input, shape index: {}]
  %s2 = inlined_call_operand.vmem [shape: f32[128,128], index: 2, kind: output, shape index: {}]
  %s3 = sld [smem:[#allocation0]]
  $region18: #{lightgcn_propagate.1} parent=0
    _
  %s5 = ssub.s32 1, %s3
  %s6 = scalar_select 0, %s5, %s3
  // Predicated region
  $region2: #{lightgcn_propagate.1} parent=0 // pred_check
    _
  $region3: #{lightgcn_propagate.1} parent=0 // pred_check_branch
    %8 = sbr.rel (0) target = $region5
  $region4: #{lightgcn_propagate.1} parent=0 // pred_region
    _
  $region5: #{lightgcn_propagate.1} parent=0 // pred_fallthru
    _
  // Predicated region
  $region6: #{lightgcn_propagate.1} parent=0 // pred_check
    _
  $region7: #{lightgcn_propagate.1} parent=0 // pred_check_branch
    %10 = sbr.rel (0) target = $region9
  $region8: #{lightgcn_propagate.1} parent=0 // pred_region
    _
  $region9: #{lightgcn_propagate.1} parent=0 // pred_fallthru
    _
  %v12 = vld [vmem:[%s1] sm:$0xff]
  %v13 = vld [vmem:[%s1 + $0x8] sm:$0xff]
  %v14 = vld [vmem:[%s1 + $0x10] sm:$0xff]
  %v15 = vld [vmem:[%s1 + $0x18] sm:$0xff]
  %v16 = vld [vmem:[%s1 + $0x20] sm:$0xff]
  %v17 = vld [vmem:[%s1 + $0x28] sm:$0xff]
  %v18 = vld [vmem:[%s1 + $0x30] sm:$0xff]
  %v19 = vld [vmem:[%s1 + $0x38] sm:$0xff]
  %v20 = vld [vmem:[%s1 + $0x40] sm:$0xff]
  %v21 = vld [vmem:[%s1 + $0x48] sm:$0xff]
  %v22 = vld [vmem:[%s1 + $0x50] sm:$0xff]
  %v23 = vld [vmem:[%s1 + $0x58] sm:$0xff]
  %v24 = vld [vmem:[%s1 + $0x60] sm:$0xff]
  %v25 = vld [vmem:[%s1 + $0x68] sm:$0xff]
  %v26 = vld [vmem:[%s1 + $0x70] sm:$0xff]
  %v27 = vld [vmem:[%s1 + $0x78] sm:$0xff]
  %28 = vst [vmem:[#allocation4] sm:$0xff] %v12
  %29 = vst [vmem:[#allocation4 + $0x8] sm:$0xff] %v13
  %30 = vst [vmem:[#allocation4 + $0x10] sm:$0xff] %v14
  %31 = vst [vmem:[#allocation4 + $0x18] sm:$0xff] %v15
  %32 = vst [vmem:[#allocation4 + $0x20] sm:$0xff] %v16
  %33 = vst [vmem:[#allocation4 + $0x28] sm:$0xff] %v17
  %34 = vst [vmem:[#allocation4 + $0x30] sm:$0xff] %v18
  %35 = vst [vmem:[#allocation4 + $0x38] sm:$0xff] %v19
  %36 = vst [vmem:[#allocation4 + $0x40] sm:$0xff] %v20
  %37 = vst [vmem:[#allocation4 + $0x48] sm:$0xff] %v21
  %38 = vst [vmem:[#allocation4 + $0x50] sm:$0xff] %v22
  %39 = vst [vmem:[#allocation4 + $0x58] sm:$0xff] %v23
  %40 = vst [vmem:[#allocation4 + $0x60] sm:$0xff] %v24
  %41 = vst [vmem:[#allocation4 + $0x68] sm:$0xff] %v25
  %42 = vst [vmem:[#allocation4 + $0x70] sm:$0xff] %v26
  %43 = vst [vmem:[#allocation4 + $0x78] sm:$0xff] %v27
  %v44 = vld [vmem:[%s1] sm:$0xff]
  %v45 = vld [vmem:[%s1 + $0x8] sm:$0xff]
  %v46 = vld [vmem:[%s1 + $0x10] sm:$0xff]
  %v47 = vld [vmem:[%s1 + $0x18] sm:$0xff]
  %v48 = vld [vmem:[%s1 + $0x20] sm:$0xff]
  %v49 = vld [vmem:[%s1 + $0x28] sm:$0xff]
  %v50 = vld [vmem:[%s1 + $0x30] sm:$0xff]
  %v51 = vld [vmem:[%s1 + $0x38] sm:$0xff]
  %v52 = vld [vmem:[%s1 + $0x40] sm:$0xff]
  %v53 = vld [vmem:[%s1 + $0x48] sm:$0xff]
  %v54 = vld [vmem:[%s1 + $0x50] sm:$0xff]
  %v55 = vld [vmem:[%s1 + $0x58] sm:$0xff]
  %v56 = vld [vmem:[%s1 + $0x60] sm:$0xff]
  %v57 = vld [vmem:[%s1 + $0x68] sm:$0xff]
  %v58 = vld [vmem:[%s1 + $0x70] sm:$0xff]
  %v59 = vld [vmem:[%s1 + $0x78] sm:$0xff]
  %v60 = vpack.c.bf16 %v45, %v44
  %v61 = vpack.c.bf16 %v47, %v46
  %v62 = vpack.c.bf16 %v49, %v48
  %v63 = vpack.c.bf16 %v51, %v50
  %v64 = vpack.c.bf16 %v53, %v52
  %v65 = vpack.c.bf16 %v55, %v54
  %v66 = vpack.c.bf16 %v57, %v56
  %v67 = vpack.c.bf16 %v59, %v58
  %68 = vst [vmem:[#allocation2] sm:$0xff] %v60
  %69 = vst [vmem:[#allocation2 + $0x8] sm:$0xff] %v61
  %70 = vst [vmem:[#allocation2 + $0x10] sm:$0xff] %v62
  %71 = vst [vmem:[#allocation2 + $0x18] sm:$0xff] %v63
  %72 = vst [vmem:[#allocation2 + $0x20] sm:$0xff] %v64
  %73 = vst [vmem:[#allocation2 + $0x28] sm:$0xff] %v65
  %74 = vst [vmem:[#allocation2 + $0x30] sm:$0xff] %v66
  %75 = vst [vmem:[#allocation2 + $0x38] sm:$0xff] %v67
  %v76 = vld [vmem:[%s0] sm:$0xf]
  %v77 = vld [vmem:[%s0 + $0x4] sm:$0xf]
  %v78 = vld [vmem:[%s0 + $0x8] sm:$0xf]
  %v79 = vld [vmem:[%s0 + $0xc] sm:$0xf]
  %v80 = vld [vmem:[%s0 + $0x10] sm:$0xf]
  %v81 = vld [vmem:[%s0 + $0x14] sm:$0xf]
  %v82 = vld [vmem:[%s0 + $0x18] sm:$0xf]
  %v83 = vld [vmem:[%s0 + $0x1c] sm:$0xf]
  %v84 = vld [vmem:[%s0 + $0x20] sm:$0xf]
  %v85 = vld [vmem:[%s0 + $0x24] sm:$0xf]
  %v86 = vld [vmem:[%s0 + $0x28] sm:$0xf]
  %v87 = vld [vmem:[%s0 + $0x2c] sm:$0xf]
  %v88 = vld [vmem:[%s0 + $0x30] sm:$0xf]
  %v89 = vld [vmem:[%s0 + $0x34] sm:$0xf]
  %v90 = vld [vmem:[%s0 + $0x38] sm:$0xf]
  %v91 = vld [vmem:[%s0 + $0x3c] sm:$0xf]
  %v92 = vld [vmem:[#allocation2] sm:$0xff]
  %v93 = vld [vmem:[#allocation2 + $0x8] sm:$0xff]
  %v94 = vld [vmem:[#allocation2 + $0x10] sm:$0xff]
  %v95 = vld [vmem:[#allocation2 + $0x18] sm:$0xff]
  %v96 = vld [vmem:[#allocation2 + $0x20] sm:$0xff]
  %v97 = vld [vmem:[#allocation2 + $0x28] sm:$0xff]
  %v98 = vld [vmem:[#allocation2 + $0x30] sm:$0xff]
  %v99 = vld [vmem:[#allocation2 + $0x38] sm:$0xff]
  %v116 = vunpack.c.l.b16 %v76
  %v117 = vunpack.c.l.b16 %v77
  %v118 = vunpack.c.l.b16 %v78
  %v119 = vunpack.c.l.b16 %v79
  %v120 = vunpack.c.l.b16 %v80
  %v121 = vunpack.c.l.b16 %v81
  %v122 = vunpack.c.l.b16 %v82
  %v123 = vunpack.c.l.b16 %v83
  %v124 = vunpack.c.l.b16 %v84
  %v125 = vunpack.c.l.b16 %v85
  %v126 = vunpack.c.l.b16 %v86
  %v127 = vunpack.c.l.b16 %v87
  %v128 = vunpack.c.l.b16 %v88
  %v129 = vunpack.c.l.b16 %v89
  %v130 = vunpack.c.l.b16 %v90
  %v131 = vunpack.c.l.b16 %v91
  %v132 = vpack.c.b16 %v117, %v116
  %v133 = vpack.c.b16 %v119, %v118
  %v134 = vpack.c.b16 %v121, %v120
  %v135 = vpack.c.b16 %v123, %v122
  %v136 = vpack.c.b16 %v125, %v124
  %v137 = vpack.c.b16 %v127, %v126
  %v138 = vpack.c.b16 %v129, %v128
  %v139 = vpack.c.b16 %v131, %v130
  %148 = vmatprep.subr.bf16.mxu0 0
  %149 = vmatpush1.bf16.msra.mxu0 %v92
  %150 = vmatprep.subr.bf16.mxu0 0
  %151 = vmatpush1.bf16.msra.mxu0 %v93
  %152 = vmatprep.subr.bf16.mxu0 0
  %153 = vmatpush1.bf16.msra.mxu0 %v94
  %154 = vmatprep.subr.bf16.mxu0 0
  %155 = vmatpush1.bf16.msra.mxu0 %v95
  %156 = vmatprep.subr.bf16.mxu0 0
  %157 = vmatpush1.bf16.msra.mxu0 %v96
  %158 = vmatprep.subr.bf16.mxu0 0
  %159 = vmatpush1.bf16.msra.mxu0 %v97
  %160 = vmatprep.subr.bf16.mxu0 0
  %161 = vmatpush1.bf16.msra.mxu0 %v98
  %162 = vmatprep.subr.bf16.mxu0 0
  %163 = vmatpush1.bf16.msra.mxu0 %v99
  %164 = vmatprep.subr.bf16.mxu0 0
  %165 = vmatpush1.bf16.msra.mxu0 0
  %166 = vmatprep.subr.bf16.mxu0 0
  %167 = vmatpush1.bf16.msra.mxu0 0
  %168 = vmatprep.subr.bf16.mxu0 0
  %169 = vmatpush1.bf16.msra.mxu0 0
  %170 = vmatprep.subr.bf16.mxu0 0
  %171 = vmatpush1.bf16.msra.mxu0 0
  %172 = vmatprep.subr.bf16.mxu0 0
  %173 = vmatpush1.bf16.msra.mxu0 0
  %174 = vmatprep.subr.bf16.mxu0 0
  %175 = vmatpush1.bf16.msra.mxu0 0
  %176 = vmatprep.subr.bf16.mxu0 0
  %177 = vmatpush1.bf16.msra.mxu0 0
  %178 = vmatprep.subr.bf16.mxu0 0
  %179 = vmatpush1.bf16.msra.mxu0 0
  %180 = vmatprep.mubr.bf16.mxu0 0
  %181 = vmatmul.mubr.bf16.gmra.mrb[0].mxu0 %v132
  %v182 = vpop.f32.mrb[0].mxu0
  %v183 = vadd.f32 0.0, %v182
  %v184 = vpop.f32.mrb[0].mxu0
  %v185 = vpop.f32.mrb[0].mxu0
  %v186 = vadd.f32 0.0, %v185
  %v187 = vpop.f32.mrb[0].mxu0
  %188 = vmatprep.mubr.bf16.mxu0 0
  %189 = vmatmul.mubr.bf16.gmra.mrb[0].mxu0 %v133
  %v190 = vpop.f32.mrb[0].mxu0
  %v191 = vadd.f32 0.0, %v190
  %v192 = vpop.f32.mrb[0].mxu0
  %v193 = vpop.f32.mrb[0].mxu0
  %v194 = vadd.f32 0.0, %v193
  %v195 = vpop.f32.mrb[0].mxu0
  %196 = vmatprep.mubr.bf16.mxu0 0
  %197 = vmatmul.mubr.bf16.gmra.mrb[0].mxu0 %v134
  %v198 = vpop.f32.mrb[0].mxu0
  %v199 = vadd.f32 0.0, %v198
  %v200 = vpop.f32.mrb[0].mxu0
  %v201 = vpop.f32.mrb[0].mxu0
  %v202 = vadd.f32 0.0, %v201
  %v203 = vpop.f32.mrb[0].mxu0
  %204 = vmatprep.mubr.bf16.mxu0 0
  %205 = vmatmul.mubr.bf16.gmra.mrb[0].mxu0 %v135
  %v206 = vpop.f32.mrb[0].mxu0
  %v207 = vadd.f32 0.0, %v206
  %v208 = vpop.f32.mrb[0].mxu0
  %v209 = vpop.f32.mrb[0].mxu0
  %v210 = vadd.f32 0.0, %v209
  %v211 = vpop.f32.mrb[0].mxu0
  %212 = vmatprep.mubr.bf16.mxu0 0
  %213 = vmatmul.mubr.bf16.gmra.mrb[0].mxu0 %v136
  %v214 = vpop.f32.mrb[0].mxu0
  %v215 = vadd.f32 0.0, %v214
  %v216 = vpop.f32.mrb[0].mxu0
  %v217 = vpop.f32.mrb[0].mxu0
  %v218 = vadd.f32 0.0, %v217
  %v219 = vpop.f32.mrb[0].mxu0
  %220 = vmatprep.mubr.bf16.mxu0 0
  %221 = vmatmul.mubr.bf16.gmra.mrb[0].mxu0 %v137
  %v222 = vpop.f32.mrb[0].mxu0
  %v223 = vadd.f32 0.0, %v222
  %v224 = vpop.f32.mrb[0].mxu0
  %v225 = vpop.f32.mrb[0].mxu0
  %v226 = vadd.f32 0.0, %v225
  %v227 = vpop.f32.mrb[0].mxu0
  %228 = vmatprep.mubr.bf16.mxu0 0
  %229 = vmatmul.mubr.bf16.gmra.mrb[0].mxu0 %v138
  %v230 = vpop.f32.mrb[0].mxu0
  %v231 = vadd.f32 0.0, %v230
  %v232 = vpop.f32.mrb[0].mxu0
  %v233 = vpop.f32.mrb[0].mxu0
  %v234 = vadd.f32 0.0, %v233
  %v235 = vpop.f32.mrb[0].mxu0
  %236 = vmatprep.mubr.bf16.mxu0 0
  %237 = vmatmul.mubr.bf16.gmra.mrb[0].mxu0 %v139
  %v238 = vpop.f32.mrb[0].mxu0
  %v239 = vadd.f32 0.0, %v238
  %v240 = vpop.f32.mrb[0].mxu0
  %v241 = vpop.f32.mrb[0].mxu0
  %v242 = vadd.f32 0.0, %v241
  %v243 = vpop.f32.mrb[0].mxu0
  %244 = vdwg.mxu0
  %v245 = vld [vmem:[#allocation4] sm:$0xff]
  %v246 = vld [vmem:[#allocation4 + $0x8] sm:$0xff]
  %v247 = vld [vmem:[#allocation4 + $0x10] sm:$0xff]
  %v248 = vld [vmem:[#allocation4 + $0x18] sm:$0xff]
  %v249 = vld [vmem:[#allocation4 + $0x20] sm:$0xff]
  %v250 = vld [vmem:[#allocation4 + $0x28] sm:$0xff]
  %v251 = vld [vmem:[#allocation4 + $0x30] sm:$0xff]
  %v252 = vld [vmem:[#allocation4 + $0x38] sm:$0xff]
  %v253 = vld [vmem:[#allocation4 + $0x40] sm:$0xff]
  %v254 = vld [vmem:[#allocation4 + $0x48] sm:$0xff]
  %v255 = vld [vmem:[#allocation4 + $0x50] sm:$0xff]
  %v256 = vld [vmem:[#allocation4 + $0x58] sm:$0xff]
  %v257 = vld [vmem:[#allocation4 + $0x60] sm:$0xff]
  %v258 = vld [vmem:[#allocation4 + $0x68] sm:$0xff]
  %v259 = vld [vmem:[#allocation4 + $0x70] sm:$0xff]
  %v260 = vld [vmem:[#allocation4 + $0x78] sm:$0xff]
  %v261 = vadd.f32 %v245, %v183
  %v262 = vadd.f32 %v246, %v186
  %v263 = vadd.f32 %v247, %v191
  %v264 = vadd.f32 %v248, %v194
  %v265 = vadd.f32 %v249, %v199
  %v266 = vadd.f32 %v250, %v202
  %v267 = vadd.f32 %v251, %v207
  %v268 = vadd.f32 %v252, %v210
  %v269 = vadd.f32 %v253, %v215
  %v270 = vadd.f32 %v254, %v218
  %v271 = vadd.f32 %v255, %v223
  %v272 = vadd.f32 %v256, %v226
  %v273 = vadd.f32 %v257, %v231
  %v274 = vadd.f32 %v258, %v234
  %v275 = vadd.f32 %v259, %v239
  %v276 = vadd.f32 %v260, %v242
  %277 = vst [vmem:[#allocation4] sm:$0xff] %v261
  %278 = vst [vmem:[#allocation4 + $0x8] sm:$0xff] %v262
  %279 = vst [vmem:[#allocation4 + $0x10] sm:$0xff] %v263
  %280 = vst [vmem:[#allocation4 + $0x18] sm:$0xff] %v264
  %281 = vst [vmem:[#allocation4 + $0x20] sm:$0xff] %v265
  %282 = vst [vmem:[#allocation4 + $0x28] sm:$0xff] %v266
  %283 = vst [vmem:[#allocation4 + $0x30] sm:$0xff] %v267
  %284 = vst [vmem:[#allocation4 + $0x38] sm:$0xff] %v268
  %285 = vst [vmem:[#allocation4 + $0x40] sm:$0xff] %v269
  %286 = vst [vmem:[#allocation4 + $0x48] sm:$0xff] %v270
  %287 = vst [vmem:[#allocation4 + $0x50] sm:$0xff] %v271
  %288 = vst [vmem:[#allocation4 + $0x58] sm:$0xff] %v272
  %289 = vst [vmem:[#allocation4 + $0x60] sm:$0xff] %v273
  %290 = vst [vmem:[#allocation4 + $0x68] sm:$0xff] %v274
  %291 = vst [vmem:[#allocation4 + $0x70] sm:$0xff] %v275
  %292 = vst [vmem:[#allocation4 + $0x78] sm:$0xff] %v276
  %v293 = vpack.c.bf16 %v186, %v183
  %v294 = vpack.c.bf16 %v194, %v191
  %v295 = vpack.c.bf16 %v202, %v199
  %v296 = vpack.c.bf16 %v210, %v207
  %v297 = vpack.c.bf16 %v218, %v215
  %v298 = vpack.c.bf16 %v226, %v223
  %v299 = vpack.c.bf16 %v234, %v231
  %v300 = vpack.c.bf16 %v242, %v239
  %301 = vst [vmem:[#allocation3] sm:$0xff] %v293
  %302 = vst [vmem:[#allocation3 + $0x8] sm:$0xff] %v294
  %303 = vst [vmem:[#allocation3 + $0x10] sm:$0xff] %v295
  %304 = vst [vmem:[#allocation3 + $0x18] sm:$0xff] %v296
  %305 = vst [vmem:[#allocation3 + $0x20] sm:$0xff] %v297
  %306 = vst [vmem:[#allocation3 + $0x28] sm:$0xff] %v298
  %307 = vst [vmem:[#allocation3 + $0x30] sm:$0xff] %v299
  %308 = vst [vmem:[#allocation3 + $0x38] sm:$0xff] %v300
  %v309 = vld [vmem:[%s0] sm:$0xf]
  %v310 = vld [vmem:[%s0 + $0x4] sm:$0xf]
  %v311 = vld [vmem:[%s0 + $0x8] sm:$0xf]
  %v312 = vld [vmem:[%s0 + $0xc] sm:$0xf]
  %v313 = vld [vmem:[%s0 + $0x10] sm:$0xf]
  %v314 = vld [vmem:[%s0 + $0x14] sm:$0xf]
  %v315 = vld [vmem:[%s0 + $0x18] sm:$0xf]
  %v316 = vld [vmem:[%s0 + $0x1c] sm:$0xf]
  %v317 = vld [vmem:[%s0 + $0x20] sm:$0xf]
  %v318 = vld [vmem:[%s0 + $0x24] sm:$0xf]
  %v319 = vld [vmem:[%s0 + $0x28] sm:$0xf]
  %v320 = vld [vmem:[%s0 + $0x2c] sm:$0xf]
  %v321 = vld [vmem:[%s0 + $0x30] sm:$0xf]
  %v322 = vld [vmem:[%s0 + $0x34] sm:$0xf]
  %v323 = vld [vmem:[%s0 + $0x38] sm:$0xf]
  %v324 = vld [vmem:[%s0 + $0x3c] sm:$0xf]
  %v325 = vld [vmem:[#allocation3] sm:$0xff]
  %v326 = vld [vmem:[#allocation3 + $0x8] sm:$0xff]
  %v327 = vld [vmem:[#allocation3 + $0x10] sm:$0xff]
  %v328 = vld [vmem:[#allocation3 + $0x18] sm:$0xff]
  %v329 = vld [vmem:[#allocation3 + $0x20] sm:$0xff]
  %v330 = vld [vmem:[#allocation3 + $0x28] sm:$0xff]
  %v331 = vld [vmem:[#allocation3 + $0x30] sm:$0xff]
  %v332 = vld [vmem:[#allocation3 + $0x38] sm:$0xff]
  %v349 = vunpack.c.l.b16 %v309
  %v350 = vunpack.c.l.b16 %v310
  %v351 = vunpack.c.l.b16 %v311
  %v352 = vunpack.c.l.b16 %v312
  %v353 = vunpack.c.l.b16 %v313
  %v354 = vunpack.c.l.b16 %v314
  %v355 = vunpack.c.l.b16 %v315
  %v356 = vunpack.c.l.b16 %v316
  %v357 = vunpack.c.l.b16 %v317
  %v358 = vunpack.c.l.b16 %v318
  %v359 = vunpack.c.l.b16 %v319
  %v360 = vunpack.c.l.b16 %v320
  %v361 = vunpack.c.l.b16 %v321
  %v362 = vunpack.c.l.b16 %v322
  %v363 = vunpack.c.l.b16 %v323
  %v364 = vunpack.c.l.b16 %v324
  %v365 = vpack.c.b16 %v350, %v349
  %v366 = vpack.c.b16 %v352, %v351
  %v367 = vpack.c.b16 %v354, %v353
  %v368 = vpack.c.b16 %v356, %v355
  %v369 = vpack.c.b16 %v358, %v357
  %v370 = vpack.c.b16 %v360, %v359
  %v371 = vpack.c.b16 %v362, %v361
  %v372 = vpack.c.b16 %v364, %v363
  %381 = vmatprep.subr.bf16.mxu0 0
  %382 = vmatpush1.bf16.msra.mxu0 %v325
  %383 = vmatprep.subr.bf16.mxu0 0
  %384 = vmatpush1.bf16.msra.mxu0 %v326
  %385 = vmatprep.subr.bf16.mxu0 0
  %386 = vmatpush1.bf16.msra.mxu0 %v327
  %387 = vmatprep.subr.bf16.mxu0 0
  %388 = vmatpush1.bf16.msra.mxu0 %v328
  %389 = vmatprep.subr.bf16.mxu0 0
  %390 = vmatpush1.bf16.msra.mxu0 %v329
  %391 = vmatprep.subr.bf16.mxu0 0
  %392 = vmatpush1.bf16.msra.mxu0 %v330
  %393 = vmatprep.subr.bf16.mxu0 0
  %394 = vmatpush1.bf16.msra.mxu0 %v331
  %395 = vmatprep.subr.bf16.mxu0 0
  %396 = vmatpush1.bf16.msra.mxu0 %v332
  %397 = vmatprep.subr.bf16.mxu0 0
  %398 = vmatpush1.bf16.msra.mxu0 0
  %399 = vmatprep.subr.bf16.mxu0 0
  %400 = vmatpush1.bf16.msra.mxu0 0
  %401 = vmatprep.subr.bf16.mxu0 0
  %402 = vmatpush1.bf16.msra.mxu0 0
  %403 = vmatprep.subr.bf16.mxu0 0
  %404 = vmatpush1.bf16.msra.mxu0 0
  %405 = vmatprep.subr.bf16.mxu0 0
  %406 = vmatpush1.bf16.msra.mxu0 0
  %407 = vmatprep.subr.bf16.mxu0 0
  %408 = vmatpush1.bf16.msra.mxu0 0
  %409 = vmatprep.subr.bf16.mxu0 0
  %410 = vmatpush1.bf16.msra.mxu0 0
  %411 = vmatprep.subr.bf16.mxu0 0
  %412 = vmatpush1.bf16.msra.mxu0 0
  %413 = vmatprep.mubr.bf16.mxu0 0
  %414 = vmatmul.mubr.bf16.gmra.mrb[0].mxu0 %v365
  %v415 = vpop.f32.mrb[0].mxu0
  %v416 = vadd.f32 0.0, %v415
  %v417 = vpop.f32.mrb[0].mxu0
  %v418 = vpop.f32.mrb[0].mxu0
  %v419 = vadd.f32 0.0, %v418
  %v420 = vpop.f32.mrb[0].mxu0
  %421 = vmatprep.mubr.bf16.mxu0 0
  %422 = vmatmul.mubr.bf16.gmra.mrb[0].mxu0 %v366
  %v423 = vpop.f32.mrb[0].mxu0
  %v424 = vadd.f32 0.0, %v423
  %v425 = vpop.f32.mrb[0].mxu0
  %v426 = vpop.f32.mrb[0].mxu0
  %v427 = vadd.f32 0.0, %v426
  %v428 = vpop.f32.mrb[0].mxu0
  %429 = vmatprep.mubr.bf16.mxu0 0
  %430 = vmatmul.mubr.bf16.gmra.mrb[0].mxu0 %v367
  %v431 = vpop.f32.mrb[0].mxu0
  %v432 = vadd.f32 0.0, %v431
  %v433 = vpop.f32.mrb[0].mxu0
  %v434 = vpop.f32.mrb[0].mxu0
  %v435 = vadd.f32 0.0, %v434
  %v436 = vpop.f32.mrb[0].mxu0
  %437 = vmatprep.mubr.bf16.mxu0 0
  %438 = vmatmul.mubr.bf16.gmra.mrb[0].mxu0 %v368
  %v439 = vpop.f32.mrb[0].mxu0
  %v440 = vadd.f32 0.0, %v439
  %v441 = vpop.f32.mrb[0].mxu0
  %v442 = vpop.f32.mrb[0].mxu0
  %v443 = vadd.f32 0.0, %v442
  %v444 = vpop.f32.mrb[0].mxu0
  %445 = vmatprep.mubr.bf16.mxu0 0
  %446 = vmatmul.mubr.bf16.gmra.mrb[0].mxu0 %v369
  %v447 = vpop.f32.mrb[0].mxu0
  %v448 = vadd.f32 0.0, %v447
  %v449 = vpop.f32.mrb[0].mxu0
  %v450 = vpop.f32.mrb[0].mxu0
  %v451 = vadd.f32 0.0, %v450
  %v452 = vpop.f32.mrb[0].mxu0
  %453 = vmatprep.mubr.bf16.mxu0 0
  %454 = vmatmul.mubr.bf16.gmra.mrb[0].mxu0 %v370
  %v455 = vpop.f32.mrb[0].mxu0
  %v456 = vadd.f32 0.0, %v455
  %v457 = vpop.f32.mrb[0].mxu0
  %v458 = vpop.f32.mrb[0].mxu0
  %v459 = vadd.f32 0.0, %v458
  %v460 = vpop.f32.mrb[0].mxu0
  %461 = vmatprep.mubr.bf16.mxu0 0
  %462 = vmatmul.mubr.bf16.gmra.mrb[0].mxu0 %v371
  %v463 = vpop.f32.mrb[0].mxu0
  %v464 = vadd.f32 0.0, %v463
  %v465 = vpop.f32.mrb[0].mxu0
  %v466 = vpop.f32.mrb[0].mxu0
  %v467 = vadd.f32 0.0, %v466
  %v468 = vpop.f32.mrb[0].mxu0
  %469 = vmatprep.mubr.bf16.mxu0 0
  %470 = vmatmul.mubr.bf16.gmra.mrb[0].mxu0 %v372
  %v471 = vpop.f32.mrb[0].mxu0
  %v472 = vadd.f32 0.0, %v471
  %v473 = vpop.f32.mrb[0].mxu0
  %v474 = vpop.f32.mrb[0].mxu0
  %v475 = vadd.f32 0.0, %v474
  %v476 = vpop.f32.mrb[0].mxu0
  %477 = vdwg.mxu0
  %v478 = vld [vmem:[#allocation4] sm:$0xff]
  %v479 = vld [vmem:[#allocation4 + $0x8] sm:$0xff]
  %v480 = vld [vmem:[#allocation4 + $0x10] sm:$0xff]
  %v481 = vld [vmem:[#allocation4 + $0x18] sm:$0xff]
  %v482 = vld [vmem:[#allocation4 + $0x20] sm:$0xff]
  %v483 = vld [vmem:[#allocation4 + $0x28] sm:$0xff]
  %v484 = vld [vmem:[#allocation4 + $0x30] sm:$0xff]
  %v485 = vld [vmem:[#allocation4 + $0x38] sm:$0xff]
  %v486 = vld [vmem:[#allocation4 + $0x40] sm:$0xff]
  %v487 = vld [vmem:[#allocation4 + $0x48] sm:$0xff]
  %v488 = vld [vmem:[#allocation4 + $0x50] sm:$0xff]
  %v489 = vld [vmem:[#allocation4 + $0x58] sm:$0xff]
  %v490 = vld [vmem:[#allocation4 + $0x60] sm:$0xff]
  %v491 = vld [vmem:[#allocation4 + $0x68] sm:$0xff]
  %v492 = vld [vmem:[#allocation4 + $0x70] sm:$0xff]
  %v493 = vld [vmem:[#allocation4 + $0x78] sm:$0xff]
  %v494 = vadd.f32 %v478, %v416
  %v495 = vadd.f32 %v479, %v419
  %v496 = vadd.f32 %v480, %v424
  %v497 = vadd.f32 %v481, %v427
  %v498 = vadd.f32 %v482, %v432
  %v499 = vadd.f32 %v483, %v435
  %v500 = vadd.f32 %v484, %v440
  %v501 = vadd.f32 %v485, %v443
  %v502 = vadd.f32 %v486, %v448
  %v503 = vadd.f32 %v487, %v451
  %v504 = vadd.f32 %v488, %v456
  %v505 = vadd.f32 %v489, %v459
  %v506 = vadd.f32 %v490, %v464
  %v507 = vadd.f32 %v491, %v467
  %v508 = vadd.f32 %v492, %v472
  %v509 = vadd.f32 %v493, %v475
  %510 = vst [vmem:[#allocation4] sm:$0xff] %v494
  %511 = vst [vmem:[#allocation4 + $0x8] sm:$0xff] %v495
  %512 = vst [vmem:[#allocation4 + $0x10] sm:$0xff] %v496
  %513 = vst [vmem:[#allocation4 + $0x18] sm:$0xff] %v497
  %514 = vst [vmem:[#allocation4 + $0x20] sm:$0xff] %v498
  %515 = vst [vmem:[#allocation4 + $0x28] sm:$0xff] %v499
  %516 = vst [vmem:[#allocation4 + $0x30] sm:$0xff] %v500
  %517 = vst [vmem:[#allocation4 + $0x38] sm:$0xff] %v501
  %518 = vst [vmem:[#allocation4 + $0x40] sm:$0xff] %v502
  %519 = vst [vmem:[#allocation4 + $0x48] sm:$0xff] %v503
  %520 = vst [vmem:[#allocation4 + $0x50] sm:$0xff] %v504
  %521 = vst [vmem:[#allocation4 + $0x58] sm:$0xff] %v505
  %522 = vst [vmem:[#allocation4 + $0x60] sm:$0xff] %v506
  %523 = vst [vmem:[#allocation4 + $0x68] sm:$0xff] %v507
  %524 = vst [vmem:[#allocation4 + $0x70] sm:$0xff] %v508
  %525 = vst [vmem:[#allocation4 + $0x78] sm:$0xff] %v509
  %v526 = vpack.c.bf16 %v419, %v416
  %v527 = vpack.c.bf16 %v427, %v424
  %v528 = vpack.c.bf16 %v435, %v432
  %v529 = vpack.c.bf16 %v443, %v440
  %v530 = vpack.c.bf16 %v451, %v448
  %v531 = vpack.c.bf16 %v459, %v456
  %v532 = vpack.c.bf16 %v467, %v464
  %v533 = vpack.c.bf16 %v475, %v472
  %534 = vst [vmem:[#allocation2] sm:$0xff] %v526
  %535 = vst [vmem:[#allocation2 + $0x8] sm:$0xff] %v527
  %536 = vst [vmem:[#allocation2 + $0x10] sm:$0xff] %v528
  %537 = vst [vmem:[#allocation2 + $0x18] sm:$0xff] %v529
  %538 = vst [vmem:[#allocation2 + $0x20] sm:$0xff] %v530
  %539 = vst [vmem:[#allocation2 + $0x28] sm:$0xff] %v531
  %540 = vst [vmem:[#allocation2 + $0x30] sm:$0xff] %v532
  %541 = vst [vmem:[#allocation2 + $0x38] sm:$0xff] %v533
  %v542 = vld [vmem:[%s0] sm:$0xf]
  %v543 = vld [vmem:[%s0 + $0x4] sm:$0xf]
  %v544 = vld [vmem:[%s0 + $0x8] sm:$0xf]
  %v545 = vld [vmem:[%s0 + $0xc] sm:$0xf]
  %v546 = vld [vmem:[%s0 + $0x10] sm:$0xf]
  %v547 = vld [vmem:[%s0 + $0x14] sm:$0xf]
  %v548 = vld [vmem:[%s0 + $0x18] sm:$0xf]
  %v549 = vld [vmem:[%s0 + $0x1c] sm:$0xf]
  %v550 = vld [vmem:[%s0 + $0x20] sm:$0xf]
  %v551 = vld [vmem:[%s0 + $0x24] sm:$0xf]
  %v552 = vld [vmem:[%s0 + $0x28] sm:$0xf]
  %v553 = vld [vmem:[%s0 + $0x2c] sm:$0xf]
  %v554 = vld [vmem:[%s0 + $0x30] sm:$0xf]
  %v555 = vld [vmem:[%s0 + $0x34] sm:$0xf]
  %v556 = vld [vmem:[%s0 + $0x38] sm:$0xf]
  %v557 = vld [vmem:[%s0 + $0x3c] sm:$0xf]
  %v558 = vld [vmem:[#allocation2] sm:$0xff]
  %v559 = vld [vmem:[#allocation2 + $0x8] sm:$0xff]
  %v560 = vld [vmem:[#allocation2 + $0x10] sm:$0xff]
  %v561 = vld [vmem:[#allocation2 + $0x18] sm:$0xff]
  %v562 = vld [vmem:[#allocation2 + $0x20] sm:$0xff]
  %v563 = vld [vmem:[#allocation2 + $0x28] sm:$0xff]
  %v564 = vld [vmem:[#allocation2 + $0x30] sm:$0xff]
  %v565 = vld [vmem:[#allocation2 + $0x38] sm:$0xff]
  %v582 = vunpack.c.l.b16 %v542
  %v583 = vunpack.c.l.b16 %v543
  %v584 = vunpack.c.l.b16 %v544
  %v585 = vunpack.c.l.b16 %v545
  %v586 = vunpack.c.l.b16 %v546
  %v587 = vunpack.c.l.b16 %v547
  %v588 = vunpack.c.l.b16 %v548
  %v589 = vunpack.c.l.b16 %v549
  %v590 = vunpack.c.l.b16 %v550
  %v591 = vunpack.c.l.b16 %v551
  %v592 = vunpack.c.l.b16 %v552
  %v593 = vunpack.c.l.b16 %v553
  %v594 = vunpack.c.l.b16 %v554
  %v595 = vunpack.c.l.b16 %v555
  %v596 = vunpack.c.l.b16 %v556
  %v597 = vunpack.c.l.b16 %v557
  %v598 = vpack.c.b16 %v583, %v582
  %v599 = vpack.c.b16 %v585, %v584
  %v600 = vpack.c.b16 %v587, %v586
  %v601 = vpack.c.b16 %v589, %v588
  %v602 = vpack.c.b16 %v591, %v590
  %v603 = vpack.c.b16 %v593, %v592
  %v604 = vpack.c.b16 %v595, %v594
  %v605 = vpack.c.b16 %v597, %v596
  %614 = vmatprep.subr.bf16.mxu0 0
  %615 = vmatpush1.bf16.msra.mxu0 %v558
  %616 = vmatprep.subr.bf16.mxu0 0
  %617 = vmatpush1.bf16.msra.mxu0 %v559
  %618 = vmatprep.subr.bf16.mxu0 0
  %619 = vmatpush1.bf16.msra.mxu0 %v560
  %620 = vmatprep.subr.bf16.mxu0 0
  %621 = vmatpush1.bf16.msra.mxu0 %v561
  %622 = vmatprep.subr.bf16.mxu0 0
  %623 = vmatpush1.bf16.msra.mxu0 %v562
  %624 = vmatprep.subr.bf16.mxu0 0
  %625 = vmatpush1.bf16.msra.mxu0 %v563
  %626 = vmatprep.subr.bf16.mxu0 0
  %627 = vmatpush1.bf16.msra.mxu0 %v564
  %628 = vmatprep.subr.bf16.mxu0 0
  %629 = vmatpush1.bf16.msra.mxu0 %v565
  %630 = vmatprep.subr.bf16.mxu0 0
  %631 = vmatpush1.bf16.msra.mxu0 0
  %632 = vmatprep.subr.bf16.mxu0 0
  %633 = vmatpush1.bf16.msra.mxu0 0
  %634 = vmatprep.subr.bf16.mxu0 0
  %635 = vmatpush1.bf16.msra.mxu0 0
  %636 = vmatprep.subr.bf16.mxu0 0
  %637 = vmatpush1.bf16.msra.mxu0 0
  %638 = vmatprep.subr.bf16.mxu0 0
  %639 = vmatpush1.bf16.msra.mxu0 0
  %640 = vmatprep.subr.bf16.mxu0 0
  %641 = vmatpush1.bf16.msra.mxu0 0
  %642 = vmatprep.subr.bf16.mxu0 0
  %643 = vmatpush1.bf16.msra.mxu0 0
  %644 = vmatprep.subr.bf16.mxu0 0
  %645 = vmatpush1.bf16.msra.mxu0 0
  %646 = vmatprep.mubr.bf16.mxu0 0
  %647 = vmatmul.mubr.bf16.gmra.mrb[0].mxu0 %v598
  %v648 = vpop.f32.mrb[0].mxu0
  %v649 = vadd.f32 0.0, %v648
  %v650 = vpop.f32.mrb[0].mxu0
  %v651 = vpop.f32.mrb[0].mxu0
  %v652 = vadd.f32 0.0, %v651
  %v653 = vpop.f32.mrb[0].mxu0
  %654 = vmatprep.mubr.bf16.mxu0 0
  %655 = vmatmul.mubr.bf16.gmra.mrb[0].mxu0 %v599
  %v656 = vpop.f32.mrb[0].mxu0
  %v657 = vadd.f32 0.0, %v656
  %v658 = vpop.f32.mrb[0].mxu0
  %v659 = vpop.f32.mrb[0].mxu0
  %v660 = vadd.f32 0.0, %v659
  %v661 = vpop.f32.mrb[0].mxu0
  %662 = vmatprep.mubr.bf16.mxu0 0
  %663 = vmatmul.mubr.bf16.gmra.mrb[0].mxu0 %v600
  %v664 = vpop.f32.mrb[0].mxu0
  %v665 = vadd.f32 0.0, %v664
  %v666 = vpop.f32.mrb[0].mxu0
  %v667 = vpop.f32.mrb[0].mxu0
  %v668 = vadd.f32 0.0, %v667
  %v669 = vpop.f32.mrb[0].mxu0
  %670 = vmatprep.mubr.bf16.mxu0 0
  %671 = vmatmul.mubr.bf16.gmra.mrb[0].mxu0 %v601
  %v672 = vpop.f32.mrb[0].mxu0
  %v673 = vadd.f32 0.0, %v672
  %v674 = vpop.f32.mrb[0].mxu0
  %v675 = vpop.f32.mrb[0].mxu0
  %v676 = vadd.f32 0.0, %v675
  %v677 = vpop.f32.mrb[0].mxu0
  %678 = vmatprep.mubr.bf16.mxu0 0
  %679 = vmatmul.mubr.bf16.gmra.mrb[0].mxu0 %v602
  %v680 = vpop.f32.mrb[0].mxu0
  %v681 = vadd.f32 0.0, %v680
  %v682 = vpop.f32.mrb[0].mxu0
  %v683 = vpop.f32.mrb[0].mxu0
  %v684 = vadd.f32 0.0, %v683
  %v685 = vpop.f32.mrb[0].mxu0
  %686 = vmatprep.mubr.bf16.mxu0 0
  %687 = vmatmul.mubr.bf16.gmra.mrb[0].mxu0 %v603
  %v688 = vpop.f32.mrb[0].mxu0
  %v689 = vadd.f32 0.0, %v688
  %v690 = vpop.f32.mrb[0].mxu0
  %v691 = vpop.f32.mrb[0].mxu0
  %v692 = vadd.f32 0.0, %v691
  %v693 = vpop.f32.mrb[0].mxu0
  %694 = vmatprep.mubr.bf16.mxu0 0
  %695 = vmatmul.mubr.bf16.gmra.mrb[0].mxu0 %v604
  %v696 = vpop.f32.mrb[0].mxu0
  %v697 = vadd.f32 0.0, %v696
  %v698 = vpop.f32.mrb[0].mxu0
  %v699 = vpop.f32.mrb[0].mxu0
  %v700 = vadd.f32 0.0, %v699
  %v701 = vpop.f32.mrb[0].mxu0
  %702 = vmatprep.mubr.bf16.mxu0 0
  %703 = vmatmul.mubr.bf16.gmra.mrb[0].mxu0 %v605
  %v704 = vpop.f32.mrb[0].mxu0
  %v705 = vadd.f32 0.0, %v704
  %v706 = vpop.f32.mrb[0].mxu0
  %v707 = vpop.f32.mrb[0].mxu0
  %v708 = vadd.f32 0.0, %v707
  %v709 = vpop.f32.mrb[0].mxu0
  %710 = vdwg.mxu0
  %v711 = vld [vmem:[#allocation4] sm:$0xff]
  %v712 = vld [vmem:[#allocation4 + $0x8] sm:$0xff]
  %v713 = vld [vmem:[#allocation4 + $0x10] sm:$0xff]
  %v714 = vld [vmem:[#allocation4 + $0x18] sm:$0xff]
  %v715 = vld [vmem:[#allocation4 + $0x20] sm:$0xff]
  %v716 = vld [vmem:[#allocation4 + $0x28] sm:$0xff]
  %v717 = vld [vmem:[#allocation4 + $0x30] sm:$0xff]
  %v718 = vld [vmem:[#allocation4 + $0x38] sm:$0xff]
  %v719 = vld [vmem:[#allocation4 + $0x40] sm:$0xff]
  %v720 = vld [vmem:[#allocation4 + $0x48] sm:$0xff]
  %v721 = vld [vmem:[#allocation4 + $0x50] sm:$0xff]
  %v722 = vld [vmem:[#allocation4 + $0x58] sm:$0xff]
  %v723 = vld [vmem:[#allocation4 + $0x60] sm:$0xff]
  %v724 = vld [vmem:[#allocation4 + $0x68] sm:$0xff]
  %v725 = vld [vmem:[#allocation4 + $0x70] sm:$0xff]
  %v726 = vld [vmem:[#allocation4 + $0x78] sm:$0xff]
  %v727 = vadd.f32 %v711, %v649
  %v728 = vadd.f32 %v712, %v652
  %v729 = vadd.f32 %v713, %v657
  %v730 = vadd.f32 %v714, %v660
  %v731 = vadd.f32 %v715, %v665
  %v732 = vadd.f32 %v716, %v668
  %v733 = vadd.f32 %v717, %v673
  %v734 = vadd.f32 %v718, %v676
  %v735 = vadd.f32 %v719, %v681
  %v736 = vadd.f32 %v720, %v684
  %v737 = vadd.f32 %v721, %v689
  %v738 = vadd.f32 %v722, %v692
  %v739 = vadd.f32 %v723, %v697
  %v740 = vadd.f32 %v724, %v700
  %v741 = vadd.f32 %v725, %v705
  %v742 = vadd.f32 %v726, %v708
  %743 = vst [vmem:[#allocation4] sm:$0xff] %v727
  %744 = vst [vmem:[#allocation4 + $0x8] sm:$0xff] %v728
  %745 = vst [vmem:[#allocation4 + $0x10] sm:$0xff] %v729
  %746 = vst [vmem:[#allocation4 + $0x18] sm:$0xff] %v730
  %747 = vst [vmem:[#allocation4 + $0x20] sm:$0xff] %v731
  %748 = vst [vmem:[#allocation4 + $0x28] sm:$0xff] %v732
  %749 = vst [vmem:[#allocation4 + $0x30] sm:$0xff] %v733
  %750 = vst [vmem:[#allocation4 + $0x38] sm:$0xff] %v734
  %751 = vst [vmem:[#allocation4 + $0x40] sm:$0xff] %v735
  %752 = vst [vmem:[#allocation4 + $0x48] sm:$0xff] %v736
  %753 = vst [vmem:[#allocation4 + $0x50] sm:$0xff] %v737
  %754 = vst [vmem:[#allocation4 + $0x58] sm:$0xff] %v738
  %755 = vst [vmem:[#allocation4 + $0x60] sm:$0xff] %v739
  %756 = vst [vmem:[#allocation4 + $0x68] sm:$0xff] %v740
  %757 = vst [vmem:[#allocation4 + $0x70] sm:$0xff] %v741
  %758 = vst [vmem:[#allocation4 + $0x78] sm:$0xff] %v742
  %v759 = vpack.c.bf16 %v652, %v649
  %v760 = vpack.c.bf16 %v660, %v657
  %v761 = vpack.c.bf16 %v668, %v665
  %v762 = vpack.c.bf16 %v676, %v673
  %v763 = vpack.c.bf16 %v684, %v681
  %v764 = vpack.c.bf16 %v692, %v689
  %v765 = vpack.c.bf16 %v700, %v697
  %v766 = vpack.c.bf16 %v708, %v705
  %767 = vst [vmem:[#allocation3] sm:$0xff] %v759
  %768 = vst [vmem:[#allocation3 + $0x8] sm:$0xff] %v760
  %769 = vst [vmem:[#allocation3 + $0x10] sm:$0xff] %v761
  %770 = vst [vmem:[#allocation3 + $0x18] sm:$0xff] %v762
  %771 = vst [vmem:[#allocation3 + $0x20] sm:$0xff] %v763
  %772 = vst [vmem:[#allocation3 + $0x28] sm:$0xff] %v764
  %773 = vst [vmem:[#allocation3 + $0x30] sm:$0xff] %v765
  %774 = vst [vmem:[#allocation3 + $0x38] sm:$0xff] %v766
  %v775 = vld [vmem:[#allocation4] sm:$0xff]
  %v776 = vld [vmem:[#allocation4 + $0x8] sm:$0xff]
  %v777 = vld [vmem:[#allocation4 + $0x10] sm:$0xff]
  %v778 = vld [vmem:[#allocation4 + $0x18] sm:$0xff]
  %v779 = vld [vmem:[#allocation4 + $0x20] sm:$0xff]
  %v780 = vld [vmem:[#allocation4 + $0x28] sm:$0xff]
  %v781 = vld [vmem:[#allocation4 + $0x30] sm:$0xff]
  %v782 = vld [vmem:[#allocation4 + $0x38] sm:$0xff]
  %v783 = vld [vmem:[#allocation4 + $0x40] sm:$0xff]
  %v784 = vld [vmem:[#allocation4 + $0x48] sm:$0xff]
  %v785 = vld [vmem:[#allocation4 + $0x50] sm:$0xff]
  %v786 = vld [vmem:[#allocation4 + $0x58] sm:$0xff]
  %v787 = vld [vmem:[#allocation4 + $0x60] sm:$0xff]
  %v788 = vld [vmem:[#allocation4 + $0x68] sm:$0xff]
  %v789 = vld [vmem:[#allocation4 + $0x70] sm:$0xff]
  %v790 = vld [vmem:[#allocation4 + $0x78] sm:$0xff]
  %v791 = vmul.f32 %v775, 0.25
  %v792 = vmul.f32 %v776, 0.25
  %v793 = vmul.f32 %v777, 0.25
  %v794 = vmul.f32 %v778, 0.25
  %v795 = vmul.f32 %v779, 0.25
  %v796 = vmul.f32 %v780, 0.25
  %v797 = vmul.f32 %v781, 0.25
  %v798 = vmul.f32 %v782, 0.25
  %v799 = vmul.f32 %v783, 0.25
  %v800 = vmul.f32 %v784, 0.25
  %v801 = vmul.f32 %v785, 0.25
  %v802 = vmul.f32 %v786, 0.25
  %v803 = vmul.f32 %v787, 0.25
  %v804 = vmul.f32 %v788, 0.25
  %v805 = vmul.f32 %v789, 0.25
  %v806 = vmul.f32 %v790, 0.25
  %807 = vst [vmem:[%s2] sm:$0xff] %v791
  %808 = vst [vmem:[%s2 + $0x8] sm:$0xff] %v792
  %809 = vst [vmem:[%s2 + $0x10] sm:$0xff] %v793
  %810 = vst [vmem:[%s2 + $0x18] sm:$0xff] %v794
  %811 = vst [vmem:[%s2 + $0x20] sm:$0xff] %v795
  %812 = vst [vmem:[%s2 + $0x28] sm:$0xff] %v796
  %813 = vst [vmem:[%s2 + $0x30] sm:$0xff] %v797
  %814 = vst [vmem:[%s2 + $0x38] sm:$0xff] %v798
  %815 = vst [vmem:[%s2 + $0x40] sm:$0xff] %v799
  %816 = vst [vmem:[%s2 + $0x48] sm:$0xff] %v800
  %817 = vst [vmem:[%s2 + $0x50] sm:$0xff] %v801
  %818 = vst [vmem:[%s2 + $0x58] sm:$0xff] %v802
  %819 = vst [vmem:[%s2 + $0x60] sm:$0xff] %v803
  %820 = vst [vmem:[%s2 + $0x68] sm:$0xff] %v804
  %821 = vst [vmem:[%s2 + $0x70] sm:$0xff] %v805
  %822 = vst [vmem:[%s2 + $0x78] sm:$0xff] %v806
  // Predicated region
  $region10: #{lightgcn_propagate.1} parent=0 // pred_check
    _
  $region11: #{lightgcn_propagate.1} parent=0 // pred_check_branch
    %824 = sbr.rel (0) target = $region13
  $region12: #{lightgcn_propagate.1} parent=0 // pred_region
    _
  $region13: #{lightgcn_propagate.1} parent=0 // pred_fallthru
    _
  // Predicated region
  $region14: #{lightgcn_propagate.1} parent=0 // pred_check
    _
  $region15: #{lightgcn_propagate.1} parent=0 // pred_check_branch
    %826 = sbr.rel (0) target = $region17
  $region16: #{lightgcn_propagate.1} parent=0 // pred_region
    _
  $region17: #{lightgcn_propagate.1} parent=0 // pred_fallthru
    _

</llo_original>
